<compile_context>
chip_gen: v7x
topology: tpu7x:2x2x1
jax: 0.10.0
libtpu: 0.0.40
codegen_flags: <defaults>
</compile_context>

<pallas_src>
import functools

import jax
import jax.numpy as jnp
import numpy as np
from jax import lax
from jax.experimental import pallas as pl
from jax.experimental.pallas import tpu as pltpu


def _block_kernel(x_ref, e_ref, m_ref, w1_ref, b1_ref, w2_ref, b2_ref, o_ref,
                  *, W, L, compute_dtype):
    """One grid step: Bt images laid side-by-side along lanes -> (C, L) tile."""
    mask = m_ref[...]                          # (9, L) f32, 0/1 validity per tap
    x = x_ref[0]                               # (C, L) f32 identity branch
    fused = x + e_ref[0]                       # fusion_fn := add

    def conv_bn(inp, w_ref, b_ref):
        # Gather the 9 zero-padded shifts via lane roll + mask, stack them on
        # sublanes, and run a single K = 9*C_in matmul on the MXU.
        pieces = []
        for dh in (-1, 0, 1):
            for dw in (-1, 0, 1):
                k = (dh + 1) * 3 + (dw + 1)    # tap index kh*3 + kw
                d = dh * W + dw                # flattened lane offset
                if d == 0:
                    pieces.append(inp)         # centre tap: no roll, no mask
                else:
                    # out[p] = inp[p + d]  (wrap / cross-image lanes are zeroed
                    # by the precomputed validity mask).
                    rolled = pltpu.roll(inp, shift=(-d) % L, axis=1)
                    pieces.append(rolled * mask[k:k + 1, :])
        stacked = jnp.concatenate(pieces, axis=0).astype(compute_dtype)   # (9C, L)
        acc = jnp.dot(w_ref[...], stacked,
                      preferred_element_type=jnp.float32)                 # (Co, L)
        return acc + b_ref[...]                # folded-BN bias, (Co, 1) broadcast

    out = jnp.maximum(conv_bn(fused, w1_ref, b1_ref), 0.0)   # conv1 + bn1 + relu
    out = conv_bn(out, w2_ref, b2_ref)                        # conv2 + bn2
    o_ref[0] = jnp.maximum(out + x, 0.0)       # downsample=None -> identity + relu


def resnet_basic_b_dual(x, extra, params, *, images_per_step=1,
                        compute_dtype=jnp.bfloat16):
    """x, extra: (B, C, H, W) float32 (NCHW, like the PyTorch module)."""
    B, C, H, W = x.shape
    HW = H * W
    Bt = images_per_step
    assert B % Bt == 0, "images_per_step must divide the batch"
    nB = B // Bt
    L = Bt * HW                                # lane extent per grid step

    def to_tiles(a):   # (B,C,H,W) -> (nB, C, Bt*HW): Bt images share the lane axis
        return (a.astype(jnp.float32).reshape(nB, Bt, C, HW)
                .transpose(0, 2, 1, 3).reshape(nB, C, L))

    x2, e2 = to_tiles(x), to_tiles(extra)

    # 0/1 validity masks for the 9 taps of a zero-padded 3x3 conv (one row per
    # tap), tiled across the Bt images that share the lane axis.  Precomputed
    # on the host so the kernel has no iota / div / mod work; the same masks
    # also kill any cross-image contamination from the lane roll.
    p = np.arange(HW)
    hh, ww = p // W, p % W
    masks_np = np.zeros((9, HW), np.float32)
    for dh in (-1, 0, 1):
        for dw in (-1, 0, 1):
            k = (dh + 1) * 3 + (dw + 1)
            masks_np[k] = ((hh + dh >= 0) & (hh + dh < H) &
                           (ww + dw >= 0) & (ww + dw < W))
    masks = jnp.asarray(np.tile(masks_np, (1, Bt)))          # (9, L)

    eps = 1e-5

    def fold(w, g, be, m, v):
        # Fold eval-mode BatchNorm into the conv: scale into weights, keep bias.
        s = g / jnp.sqrt(v + eps)                                # (Co,)
        bias = (be - m * s).reshape(-1, 1).astype(jnp.float32)   # (Co, 1)
        wf = w * s[:, None, None, None]                          # OIHW, scale folded
        # (Co, Ci, 3, 3) -> (Co, 9*Ci) with column index k*Ci + ci, k = kh*3+kw,
        # matching the sublane stacking order inside the kernel.
        wp = jnp.transpose(wf, (0, 2, 3, 1)).reshape(w.shape[0], 9 * w.shape[1])
        return wp.astype(compute_dtype), bias

    w1, b1 = fold(params["w1"], params["g1"], params["be1"], params["m1"], params["v1"])
    w2, b2 = fold(params["w2"], params["g2"], params["be2"], params["m2"], params["v2"])

    kernel = functools.partial(_block_kernel, W=W, L=L, compute_dtype=compute_dtype)
    act_spec = pl.BlockSpec((1, C, L), lambda i: (i, 0, 0))
    mask_spec = pl.BlockSpec((9, L), lambda i: (0, 0))
    w_spec = pl.BlockSpec((C, 9 * C), lambda i: (0, 0))
    b_spec = pl.BlockSpec((C, 1), lambda i: (0, 0))

    out = pl.pallas_call(
        kernel,
        out_shape=jax.ShapeDtypeStruct((nB, C, L), jnp.float32),
        grid=(nB,),
        in_specs=[act_spec, act_spec, mask_spec, w_spec, b_spec, w_spec, b_spec],
        out_specs=act_spec,
        compiler_params=pltpu.CompilerParams(dimension_semantics=("parallel",)),
    )(x2, e2, masks, w1, b1, w2, b2)

    # (nB, C, Bt*HW) -> (B, C, H, W)
    return (out.reshape(nB, C, Bt, HW).transpose(0, 2, 1, 3)
            .reshape(B, C, H, W))


def reference(x, extra, params):
    """Pure-JAX reference (lax conv, NCHW) mirroring the PyTorch forward."""
    eps = 1e-5

    def conv(z, w):
        return lax.conv_general_dilated(z, w, (1, 1), ((1, 1), (1, 1)),
                                        dimension_numbers=("NCHW", "OIHW", "NCHW"))

    def bn(z, g, be, m, v):
        s = g / jnp.sqrt(v + eps)
        return z * s[None, :, None, None] + (be - m * s)[None, :, None, None]

    y = x + extra
    o = jnp.maximum(bn(conv(y, params["w1"]),
                       params["g1"], params["be1"], params["m1"], params["v1"]), 0.0)
    o = bn(conv(o, params["w2"]),
           params["g2"], params["be2"], params["m2"], params["v2"])
    return jnp.maximum(o + x, 0.0)


if __name__ == "__main__":
    B, C, H, W = 2, 8, 16, 16
    key = jax.random.PRNGKey(0)
    ks = jax.random.split(key, 12)
    x = jax.random.normal(ks[0], (B, C, H, W), jnp.float32)
    extra = jax.random.normal(ks[1], (B, C, H, W), jnp.float32)
    params = {
        "w1": jax.random.normal(ks[2], (C, C, 3, 3), jnp.float32) * 0.1,
        "g1": jax.random.uniform(ks[3], (C,), jnp.float32, 0.5, 1.5),
        "be1": jax.random.normal(ks[4], (C,), jnp.float32) * 0.1,
        "m1": jax.random.normal(ks[5], (C,), jnp.float32) * 0.1,
        "v1": jax.random.uniform(ks[6], (C,), jnp.float32, 0.5, 1.5),
        "w2": jax.random.normal(ks[7], (C, C, 3, 3), jnp.float32) * 0.1,
        "g2": jax.random.uniform(ks[8], (C,), jnp.float32, 0.5, 1.5),
        "be2": jax.random.normal(ks[9], (C,), jnp.float32) * 0.1,
        "m2": jax.random.normal(ks[10], (C,), jnp.float32) * 0.1,
        "v2": jax.random.uniform(ks[11], (C,), jnp.float32, 0.5, 1.5),
    }

    ref = reference(x, extra, params)

    # f32 MXU-operand path, one image per grid step (grid=(B,) stays parallel
    # across both TensorCores on v7x): tight numerical check.
    out_f32 = jax.block_until_ready(
        resnet_basic_b_dual(x, extra, params, images_per_step=1,
                            compute_dtype=jnp.float32))
    np.testing.assert_allclose(np.asarray(out_f32), np.asarray(ref),
                               rtol=1e-3, atol=1e-3)

    # bf16 MXU-operand path (v6e/v7x fast path) + 2 images per grid step
    # (512-wide lane-dense tiles): looser tolerance for bf16 operand rounding,
    # accumulation stays f32.
    out_bf16 = jax.block_until_ready(
        resnet_basic_b_dual(x, extra, params, images_per_step=2,
                            compute_dtype=jnp.bfloat16))
    np.testing.assert_allclose(np.asarray(out_bf16), np.asarray(ref),
                               rtol=5e-2, atol=5e-2)

    print("KERNEL_OK")
</pallas_src>

<mosaic_0001>
module attributes {stable_mosaic.version = 11 : i64} {
  func.func @_block_kernel(%arg0: i32, %arg1: memref<1x8x256xf32, #tpu.memory_space<vmem>>, %arg2: memref<1x8x256xf32, #tpu.memory_space<vmem>>, %arg3: memref<9x256xf32, #tpu.memory_space<vmem>>, %arg4: memref<8x72xf32, #tpu.memory_space<vmem>>, %arg5: memref<8x1xf32, #tpu.memory_space<vmem>>, %arg6: memref<8x72xf32, #tpu.memory_space<vmem>>, %arg7: memref<8x1xf32, #tpu.memory_space<vmem>>, %arg8: memref<1x8x256xf32, #tpu.memory_space<vmem>>) attributes {dimension_semantics = [#tpu.dimension_semantics<parallel>], iteration_bounds = array<i64: 2>, scalar_prefetch = 0 : i64, scratch_operands = 0 : i64, tpu.core_type = #tpu.core_type<tc>, window_params = [{transform_indices = @transform_0, window_bounds = array<i64: 1, 8, 256>}, {transform_indices = @transform_1, window_bounds = array<i64: 1, 8, 256>}, {pipeline_mode = #tpu.pipeline_mode<synchronous>, transform_indices = @transform_2, window_bounds = array<i64: 9, 256>}, {pipeline_mode = #tpu.pipeline_mode<synchronous>, transform_indices = @transform_3, window_bounds = array<i64: 8, 72>}, {pipeline_mode = #tpu.pipeline_mode<synchronous>, transform_indices = @transform_4, window_bounds = array<i64: 8, 1>}, {pipeline_mode = #tpu.pipeline_mode<synchronous>, transform_indices = @transform_5, window_bounds = array<i64: 8, 72>}, {pipeline_mode = #tpu.pipeline_mode<synchronous>, transform_indices = @transform_6, window_bounds = array<i64: 8, 1>}, {transform_indices = @transform_7, window_bounds = array<i64: 1, 8, 256>}]} {
    %c0 = arith.constant 0 : index
    %c0_0 = arith.constant 0 : index
    %0 = vector.load %arg3[%c0, %c0_0] : memref<9x256xf32, #tpu.memory_space<vmem>>, vector<9x256xf32>
    %c0_1 = arith.constant 0 : index
    %c0_2 = arith.constant 0 : index
    %c0_3 = arith.constant 0 : index
    %1 = vector.load %arg1[%c0_1, %c0_2, %c0_3] : memref<1x8x256xf32, #tpu.memory_space<vmem>>, vector<1x8x256xf32>
    %2 = vector.shape_cast %1 : vector<1x8x256xf32> to vector<8x256xf32>
    %c0_4 = arith.constant 0 : index
    %c0_5 = arith.constant 0 : index
    %c0_6 = arith.constant 0 : index
    %3 = vector.load %arg2[%c0_4, %c0_5, %c0_6] : memref<1x8x256xf32, #tpu.memory_space<vmem>>, vector<1x8x256xf32>
    %4 = vector.shape_cast %3 : vector<1x8x256xf32> to vector<8x256xf32>
    %5 = arith.addf %2, %4 : vector<8x256xf32>
    %c17_i32 = arith.constant 17 : i32
    %6 = tpu.dynamic_rotate %5 by %c17_i32 dim 1 : vector<8x256xf32>, i32 -> vector<8x256xf32>
    %7 = vector.extract_strided_slice %0 {offsets = [0, 0], sizes = [1, 256], strides = [1, 1]} : vector<9x256xf32> to vector<1x256xf32>
    %8 = vector.broadcast %7 : vector<1x256xf32> to vector<8x256xf32>
    %9 = arith.mulf %6, %8 : vector<8x256xf32>
    %c16_i32 = arith.constant 16 : i32
    %10 = tpu.dynamic_rotate %5 by %c16_i32 dim 1 : vector<8x256xf32>, i32 -> vector<8x256xf32>
    %11 = vector.extract_strided_slice %0 {offsets = [1, 0], sizes = [1, 256], strides = [1, 1]} : vector<9x256xf32> to vector<1x256xf32>
    %12 = vector.broadcast %11 : vector<1x256xf32> to vector<8x256xf32>
    %13 = arith.mulf %10, %12 : vector<8x256xf32>
    %c15_i32 = arith.constant 15 : i32
    %14 = tpu.dynamic_rotate %5 by %c15_i32 dim 1 : vector<8x256xf32>, i32 -> vector<8x256xf32>
    %15 = vector.extract_strided_slice %0 {offsets = [2, 0], sizes = [1, 256], strides = [1, 1]} : vector<9x256xf32> to vector<1x256xf32>
    %16 = vector.broadcast %15 : vector<1x256xf32> to vector<8x256xf32>
    %17 = arith.mulf %14, %16 : vector<8x256xf32>
    %c1_i32 = arith.constant 1 : i32
    %18 = tpu.dynamic_rotate %5 by %c1_i32 dim 1 : vector<8x256xf32>, i32 -> vector<8x256xf32>
    %19 = vector.extract_strided_slice %0 {offsets = [3, 0], sizes = [1, 256], strides = [1, 1]} : vector<9x256xf32> to vector<1x256xf32>
    %20 = vector.broadcast %19 : vector<1x256xf32> to vector<8x256xf32>
    %21 = arith.mulf %18, %20 : vector<8x256xf32>
    %c255_i32 = arith.constant 255 : i32
    %22 = tpu.dynamic_rotate %5 by %c255_i32 dim 1 : vector<8x256xf32>, i32 -> vector<8x256xf32>
    %23 = vector.extract_strided_slice %0 {offsets = [5, 0], sizes = [1, 256], strides = [1, 1]} : vector<9x256xf32> to vector<1x256xf32>
    %24 = vector.broadcast %23 : vector<1x256xf32> to vector<8x256xf32>
    %25 = arith.mulf %22, %24 : vector<8x256xf32>
    %c241_i32 = arith.constant 241 : i32
    %26 = tpu.dynamic_rotate %5 by %c241_i32 dim 1 : vector<8x256xf32>, i32 -> vector<8x256xf32>
    %27 = vector.extract_strided_slice %0 {offsets = [6, 0], sizes = [1, 256], strides = [1, 1]} : vector<9x256xf32> to vector<1x256xf32>
    %28 = vector.broadcast %27 : vector<1x256xf32> to vector<8x256xf32>
    %29 = arith.mulf %26, %28 : vector<8x256xf32>
    %c240_i32 = arith.constant 240 : i32
    %30 = tpu.dynamic_rotate %5 by %c240_i32 dim 1 : vector<8x256xf32>, i32 -> vector<8x256xf32>
    %31 = vector.extract_strided_slice %0 {offsets = [7, 0], sizes = [1, 256], strides = [1, 1]} : vector<9x256xf32> to vector<1x256xf32>
    %32 = vector.broadcast %31 : vector<1x256xf32> to vector<8x256xf32>
    %33 = arith.mulf %30, %32 : vector<8x256xf32>
    %c239_i32 = arith.constant 239 : i32
    %34 = tpu.dynamic_rotate %5 by %c239_i32 dim 1 : vector<8x256xf32>, i32 -> vector<8x256xf32>
    %35 = vector.extract_strided_slice %0 {offsets = [8, 0], sizes = [1, 256], strides = [1, 1]} : vector<9x256xf32> to vector<1x256xf32>
    %36 = vector.broadcast %35 : vector<1x256xf32> to vector<8x256xf32>
    %37 = arith.mulf %34, %36 : vector<8x256xf32>
    %38 = tpu.concatenate %9, %13, %17, %21, %5, %25, %29, %33, %37 in 0 : vector<8x256xf32>, vector<8x256xf32>, vector<8x256xf32>, vector<8x256xf32>, vector<8x256xf32>, vector<8x256xf32>, vector<8x256xf32>, vector<8x256xf32>, vector<8x256xf32> -> vector<72x256xf32>
    %c0_7 = arith.constant 0 : index
    %c0_8 = arith.constant 0 : index
    %39 = vector.load %arg4[%c0_7, %c0_8] : memref<8x72xf32, #tpu.memory_space<vmem>>, vector<8x72xf32>
    %cst = arith.constant dense<0.000000e+00> : vector<8x256xf32>
    %40 = tpu.matmul %39, %38, %cst {dimension_numbers = #tpu.dot_dimension_numbers<[1], [0], [0], [1], [0, 0, 1, 1], [], []>} : vector<8x72xf32>, vector<72x256xf32>, vector<8x256xf32> -> vector<8x256xf32>
    %c0_9 = arith.constant 0 : index
    %c0_10 = arith.constant 0 : index
    %41 = vector.load %arg5[%c0_9, %c0_10] : memref<8x1xf32, #tpu.memory_space<vmem>>, vector<8x1xf32>
    %42 = vector.broadcast %41 : vector<8x1xf32> to vector<8x256xf32>
    %43 = arith.addf %40, %42 : vector<8x256xf32>
    %cst_11 = arith.constant 0.000000e+00 : f32
    %44 = vector.broadcast %cst_11 : f32 to vector<8x256xf32>
    %45 = arith.maximumf %43, %44 : vector<8x256xf32>
    %c17_i32_12 = arith.constant 17 : i32
    %46 = tpu.dynamic_rotate %45 by %c17_i32_12 dim 1 : vector<8x256xf32>, i32 -> vector<8x256xf32>
    %47 = vector.extract_strided_slice %0 {offsets = [0, 0], sizes = [1, 256], strides = [1, 1]} : vector<9x256xf32> to vector<1x256xf32>
    %48 = vector.broadcast %47 : vector<1x256xf32> to vector<8x256xf32>
    %49 = arith.mulf %46, %48 : vector<8x256xf32>
    %c16_i32_13 = arith.constant 16 : i32
    %50 = tpu.dynamic_rotate %45 by %c16_i32_13 dim 1 : vector<8x256xf32>, i32 -> vector<8x256xf32>
    %51 = vector.extract_strided_slice %0 {offsets = [1, 0], sizes = [1, 256], strides = [1, 1]} : vector<9x256xf32> to vector<1x256xf32>
    %52 = vector.broadcast %51 : vector<1x256xf32> to vector<8x256xf32>
    %53 = arith.mulf %50, %52 : vector<8x256xf32>
    %c15_i32_14 = arith.constant 15 : i32
    %54 = tpu.dynamic_rotate %45 by %c15_i32_14 dim 1 : vector<8x256xf32>, i32 -> vector<8x256xf32>
    %55 = vector.extract_strided_slice %0 {offsets = [2, 0], sizes = [1, 256], strides = [1, 1]} : vector<9x256xf32> to vector<1x256xf32>
    %56 = vector.broadcast %55 : vector<1x256xf32> to vector<8x256xf32>
    %57 = arith.mulf %54, %56 : vector<8x256xf32>
    %c1_i32_15 = arith.constant 1 : i32
    %58 = tpu.dynamic_rotate %45 by %c1_i32_15 dim 1 : vector<8x256xf32>, i32 -> vector<8x256xf32>
    %59 = vector.extract_strided_slice %0 {offsets = [3, 0], sizes = [1, 256], strides = [1, 1]} : vector<9x256xf32> to vector<1x256xf32>
    %60 = vector.broadcast %59 : vector<1x256xf32> to vector<8x256xf32>
    %61 = arith.mulf %58, %60 : vector<8x256xf32>
    %c255_i32_16 = arith.constant 255 : i32
    %62 = tpu.dynamic_rotate %45 by %c255_i32_16 dim 1 : vector<8x256xf32>, i32 -> vector<8x256xf32>
    %63 = vector.extract_strided_slice %0 {offsets = [5, 0], sizes = [1, 256], strides = [1, 1]} : vector<9x256xf32> to vector<1x256xf32>
    %64 = vector.broadcast %63 : vector<1x256xf32> to vector<8x256xf32>
    %65 = arith.mulf %62, %64 : vector<8x256xf32>
    %c241_i32_17 = arith.constant 241 : i32
    %66 = tpu.dynamic_rotate %45 by %c241_i32_17 dim 1 : vector<8x256xf32>, i32 -> vector<8x256xf32>
    %67 = vector.extract_strided_slice %0 {offsets = [6, 0], sizes = [1, 256], strides = [1, 1]} : vector<9x256xf32> to vector<1x256xf32>
    %68 = vector.broadcast %67 : vector<1x256xf32> to vector<8x256xf32>
    %69 = arith.mulf %66, %68 : vector<8x256xf32>
    %c240_i32_18 = arith.constant 240 : i32
    %70 = tpu.dynamic_rotate %45 by %c240_i32_18 dim 1 : vector<8x256xf32>, i32 -> vector<8x256xf32>
    %71 = vector.extract_strided_slice %0 {offsets = [7, 0], sizes = [1, 256], strides = [1, 1]} : vector<9x256xf32> to vector<1x256xf32>
    %72 = vector.broadcast %71 : vector<1x256xf32> to vector<8x256xf32>
    %73 = arith.mulf %70, %72 : vector<8x256xf32>
    %c239_i32_19 = arith.constant 239 : i32
    %74 = tpu.dynamic_rotate %45 by %c239_i32_19 dim 1 : vector<8x256xf32>, i32 -> vector<8x256xf32>
    %75 = vector.extract_strided_slice %0 {offsets = [8, 0], sizes = [1, 256], strides = [1, 1]} : vector<9x256xf32> to vector<1x256xf32>
    %76 = vector.broadcast %75 : vector<1x256xf32> to vector<8x256xf32>
    %77 = arith.mulf %74, %76 : vector<8x256xf32>
    %78 = tpu.concatenate %49, %53, %57, %61, %45, %65, %69, %73, %77 in 0 : vector<8x256xf32>, vector<8x256xf32>, vector<8x256xf32>, vector<8x256xf32>, vector<8x256xf32>, vector<8x256xf32>, vector<8x256xf32>, vector<8x256xf32>, vector<8x256xf32> -> vector<72x256xf32>
    %c0_20 = arith.constant 0 : index
    %c0_21 = arith.constant 0 : index
    %79 = vector.load %arg6[%c0_20, %c0_21] : memref<8x72xf32, #tpu.memory_space<vmem>>, vector<8x72xf32>
    %cst_22 = arith.constant dense<0.000000e+00> : vector<8x256xf32>
    %80 = tpu.matmul %79, %78, %cst_22 {dimension_numbers = #tpu.dot_dimension_numbers<[1], [0], [0], [1], [0, 0, 1, 1], [], []>} : vector<8x72xf32>, vector<72x256xf32>, vector<8x256xf32> -> vector<8x256xf32>
    %c0_23 = arith.constant 0 : index
    %c0_24 = arith.constant 0 : index
    %81 = vector.load %arg7[%c0_23, %c0_24] : memref<8x1xf32, #tpu.memory_space<vmem>>, vector<8x1xf32>
    %82 = vector.broadcast %81 : vector<8x1xf32> to vector<8x256xf32>
    %83 = arith.addf %80, %82 : vector<8x256xf32>
    %84 = arith.addf %83, %2 : vector<8x256xf32>
    %cst_25 = arith.constant 0.000000e+00 : f32
    %85 = vector.broadcast %cst_25 : f32 to vector<8x256xf32>
    %86 = arith.maximumf %84, %85 : vector<8x256xf32>
    %c0_26 = arith.constant 0 : index
    %c0_27 = arith.constant 0 : index
    %c0_28 = arith.constant 0 : index
    %87 = vector.load %arg8[%c0_26, %c0_27, %c0_28] : memref<1x8x256xf32, #tpu.memory_space<vmem>>, vector<1x8x256xf32>
    %88 = vector.shape_cast %87 : vector<1x8x256xf32> to vector<8x256xf32>
    %89 = vector.shape_cast %86 : vector<8x256xf32> to vector<1x8x256xf32>
    tpu.vector_store %arg8[%c0_26, %c0_27, %c0_28], %89 {strides = array<i32>} : memref<1x8x256xf32, #tpu.memory_space<vmem>>, vector<1x8x256xf32>,
    return
  }
  func.func @transform_0(%arg0: i32) -> (i32, i32, i32) {
    %c0_i32 = arith.constant 0 : i32
    %c0_i32_0 = arith.constant 0 : i32
    %c0_i32_1 = arith.constant 0 : i32
    return %arg0, %c0_i32, %c0_i32_0 : i32, i32, i32
  }
  func.func @transform_1(%arg0: i32) -> (i32, i32, i32) {
    %c0_i32 = arith.constant 0 : i32
    %c0_i32_0 = arith.constant 0 : i32
    %c0_i32_1 = arith.constant 0 : i32
    return %arg0, %c0_i32, %c0_i32_0 : i32, i32, i32
  }
  func.func @transform_2(%arg0: i32) -> (i32, i32) {
    %c0_i32 = arith.constant 0 : i32
    %c0_i32_0 = arith.constant 0 : i32
    %c0_i32_1 = arith.constant 0 : i32
    return %c0_i32, %c0_i32_0 : i32, i32
  }
  func.func @transform_3(%arg0: i32) -> (i32, i32) {
    %c0_i32 = arith.constant 0 : i32
    %c0_i32_0 = arith.constant 0 : i32
    %c0_i32_1 = arith.constant 0 : i32
    return %c0_i32, %c0_i32_0 : i32, i32
  }
  func.func @transform_4(%arg0: i32) -> (i32, i32) {
    %c0_i32 = arith.constant 0 : i32
    %c0_i32_0 = arith.constant 0 : i32
    %c0_i32_1 = arith.constant 0 : i32
    return %c0_i32, %c0_i32_0 : i32, i32
  }
  func.func @transform_5(%arg0: i32) -> (i32, i32) {
    %c0_i32 = arith.constant 0 : i32
    %c0_i32_0 = arith.constant 0 : i32
    %c0_i32_1 = arith.constant 0 : i32
    return %c0_i32, %c0_i32_0 : i32, i32
  }
  func.func @transform_6(%arg0: i32) -> (i32, i32) {
    %c0_i32 = arith.constant 0 : i32
    %c0_i32_0 = arith.constant 0 : i32
    %c0_i32_1 = arith.constant 0 : i32
    return %c0_i32, %c0_i32_0 : i32, i32
  }
  func.func @transform_7(%arg0: i32) -> (i32, i32, i32) {
    %c0_i32 = arith.constant 0 : i32
    %c0_i32_0 = arith.constant 0 : i32
    %c0_i32_1 = arith.constant 0 : i32
    return %arg0, %c0_i32, %c0_i32_0 : i32, i32, i32
  }
}

</mosaic_0001>

<llo_original>
// kernel: tpu_custom_call.1
$region0: #{tpu_custom_call.1}
  #allocation0 [shape = 'u32[]', space=smem, size = 0x4, offset = 0x4, fixed_abs, tag = 'smem constant byte address 0x4 - core index']
  #allocation1 [shape = 'u32[144,128]{1,0:T(1,128)}', space=vmem, size = 0x12000, scoped, tag = 'internal scratch']
  %s0 = inlined_call_operand.hbm [shape: f32[2,8,256], index: 0, kind: input, shape index: {}]
  %s1 = inlined_call_operand.hbm [shape: f32[2,8,256], index: 1, kind: input, shape index: {}]
  %s2 = inlined_call_operand.hbm [shape: f32[9,256], index: 2, kind: input, shape index: {}]
  %s3 = inlined_call_operand.vmem [shape: f32[8,72], index: 3, kind: input, shape index: {}]
  %s4 = inlined_call_operand.vmem [shape: f32[8,1], index: 4, kind: input, shape index: {}]
  %s5 = inlined_call_operand.vmem [shape: f32[8,72], index: 5, kind: input, shape index: {}]
  %s6 = inlined_call_operand.vmem [shape: f32[8,1], index: 6, kind: input, shape index: {}]
  %s7 = inlined_call_operand.hbm [shape: f32[2,8,256], index: 7, kind: output, shape index: {}]
  %s8 = sld [smem:[#allocation0]]
  $region73: #{tpu_custom_call.1} parent=0
    _
  %s10 = ssub.s32 1, %s8
  %s11 = scalar_select 0, %s10, %s8
  $region1: #{tpu_custom_call.1} parent=0
    #allocation2 [shape = 'u8[16384]{0}', space=vmem, size = 0x4000, scoped, tag = 'input window, operand 0']
    #allocation3 [shape = 's32[2]{0}', space=sflag, size = 0x8, scoped, tag = 'scoped memory for tpu_custom_call.1']
    #allocation4 [shape = 's32[2]{0}', space=sflag, size = 0x8, scoped, tag = 'scoped memory for tpu_custom_call.1']
    #allocation5 [shape = 'u8[16384]{0}', space=vmem, size = 0x4000, scoped, tag = 'input window, operand 1']
    #allocation6 [shape = 's32[2]{0}', space=sflag, size = 0x8, scoped, tag = 'scoped memory for tpu_custom_call.1']
    #allocation7 [shape = 'u8[16384]{0}', space=vmem, size = 0x4000, scoped, tag = 'input window, operand 2, single buffered']
    #allocation8 [shape = 'u8[16384]{0}', space=vmem, size = 0x4000, scoped, tag = 'output window, operand 0']
    %12 = vsyncpa [#allocation3], 0
    %s13 = scalar_lea.sflag [#allocation3], 1
    %14 = vsyncpa %s13, 0
    %15 = vsyncpa [#allocation6], 0
    %s16 = scalar_lea.sflag [#allocation6], 1
    %17 = vsyncpa %s16, 0
    %18 = vsyncpa [#allocation4], 0
    %s19 = scalar_lea.sflag [#allocation4], 1
    %20 = vsyncpa %s19, 0
    loop: start=0, step=1, limit=4
    $region2: #{tpu_custom_call.1} parent=1 // loop_pre_header
      _
    $region3: #{tpu_custom_call.1} parent=1 // loop_header
      %s22 = sphi 0, %s26
      %p23 = scmp.ge.s32.totalorder %s22, 4
      %s32 = sphi 0, %s34
      %s35 = sphi 0, %s32
      %s36 = sphi 0, %s35
      %s52 = sphi 0, %s36
      %s58 = sphi 0, %s60
      %s61 = sphi 0, %s58
      %s62 = sphi 0, %s61
      %s78 = sphi 0, %s62
      %s82 = sphi 0, %s82
      %s84 = sphi 0, %s82
      %s85 = sphi 0, %s84
      %s99 = sphi 0, %s85
      %s103 = sphi 0, %s103
      %s105 = sphi 0, %s103
      %s106 = sphi 0, %s105
      %s120 = sphi 0, %s106
      %s124 = sphi 0, %s124
      %s126 = sphi 0, %s124
      %s127 = sphi 0, %s126
      %s141 = sphi 0, %s127
      %s145 = sphi 0, %s145
      %s147 = sphi 0, %s145
      %s148 = sphi 0, %s147
      %s162 = sphi 0, %s148
      %s166 = sphi 0, %s166
      %s168 = sphi 0, %s166
      %s169 = sphi 0, %s168
      %s183 = sphi 0, %s169
      %s189 = sphi 0, %s191
      %s192 = sphi 0, %s189
      %s193 = sphi 0, %s192
      %s209 = sphi 0, %s193
    $region4: #{tpu_custom_call.1} parent=1 // loop_header_branch
      %25 = sbr.rel (%p23) target = $region8
    $region5: #{tpu_custom_call.1} parent=1 // loop_body
      %s27 = ssub.s32 %s22, 1
      %s28 = ssub.s32 %s22, 2
      %s29 = sadd.s32 %s22, 1
      %s30 = ssub.s32 %s22, %s29
      %p31 = scmp.eq.s32.totalorder %s30, 0
      %s33 = sadd.s32 %s32, 1
      %s34 = scalar_select %p31, %s32, %s33
      %p37 = pneg %p31
      %p38 = scmp.eq.s32.totalorder %s22, 1
      %p39 = por %p37, %p38
      %p40 = scmp.ne.s32.totalorder %s32, %s35
      %p41 = scmp.eq.s32.totalorder %s22, 0
      %p42 = por %p40, %p41
      %p43 = scmp.ne.s32.totalorder %s32, %s35
      %p44 = scmp.eq.s32.totalorder %s27, 1
      %p45 = por %p43, %p44
      %p46 = scmp.ne.s32.totalorder %s35, %s36
      %p47 = scmp.eq.s32.totalorder %s27, 0
      %p48 = por %p46, %p47
      %p49 = scmp.ne.s32.totalorder %s35, %s36
      %p50 = scmp.eq.s32.totalorder %s28, 1
      %p51 = por %p49, %p50
      %p53 = scmp.ne.s32.totalorder %s36, %s52
      %p54 = scmp.eq.s32.totalorder %s28, 0
      %p55 = por %p53, %p54
      %s56 = ssub.s32 %s22, %s29
      %p57 = scmp.eq.s32.totalorder %s56, 0
      %s59 = sadd.s32 %s58, 1
      %s60 = scalar_select %p57, %s58, %s59
      %p63 = pneg %p57
      %p64 = scmp.eq.s32.totalorder %s22, 1
      %p65 = por %p63, %p64
      %p66 = scmp.ne.s32.totalorder %s58, %s61
      %p67 = scmp.eq.s32.totalorder %s22, 0
      %p68 = por %p66, %p67
      %p69 = scmp.ne.s32.totalorder %s58, %s61
      %p70 = scmp.eq.s32.totalorder %s27, 1
      %p71 = por %p69, %p70
      %p72 = scmp.ne.s32.totalorder %s61, %s62
      %p73 = scmp.eq.s32.totalorder %s27, 0
      %p74 = por %p72, %p73
      %p75 = scmp.ne.s32.totalorder %s61, %s62
      %p76 = scmp.eq.s32.totalorder %s28, 1
      %p77 = por %p75, %p76
      %p79 = scmp.ne.s32.totalorder %s62, %s78
      %p80 = scmp.eq.s32.totalorder %s28, 0
      %p81 = por %p79, %p80
      %s83 = sadd.s32 %s82, 1
      %p86 = scmp.eq.s32.totalorder %s22, 1
      %p87 = scmp.ne.s32.totalorder %s82, %s84
      %p88 = scmp.eq.s32.totalorder %s22, 0
      %p89 = por %p87, %p88
      %p90 = scmp.ne.s32.totalorder %s82, %s84
      %p91 = scmp.eq.s32.totalorder %s27, 1
      %p92 = por %p90, %p91
      %p93 = scmp.ne.s32.totalorder %s84, %s85
      %p94 = scmp.eq.s32.totalorder %s27, 0
      %p95 = por %p93, %p94
      %p96 = scmp.ne.s32.totalorder %s84, %s85
      %p97 = scmp.eq.s32.totalorder %s28, 1
      %p98 = por %p96, %p97
      %p100 = scmp.ne.s32.totalorder %s85, %s99
      %p101 = scmp.eq.s32.totalorder %s28, 0
      %p102 = por %p100, %p101
      %s104 = sadd.s32 %s103, 1
      %p107 = scmp.eq.s32.totalorder %s22, 1
      %p108 = scmp.ne.s32.totalorder %s103, %s105
      %p109 = scmp.eq.s32.totalorder %s22, 0
      %p110 = por %p108, %p109
      %p111 = scmp.ne.s32.totalorder %s103, %s105
      %p112 = scmp.eq.s32.totalorder %s27, 1
      %p113 = por %p111, %p112
      %p114 = scmp.ne.s32.totalorder %s105, %s106
      %p115 = scmp.eq.s32.totalorder %s27, 0
      %p116 = por %p114, %p115
      %p117 = scmp.ne.s32.totalorder %s105, %s106
      %p118 = scmp.eq.s32.totalorder %s28, 1
      %p119 = por %p117, %p118
      %p121 = scmp.ne.s32.totalorder %s106, %s120
      %p122 = scmp.eq.s32.totalorder %s28, 0
      %p123 = por %p121, %p122
      %s125 = sadd.s32 %s124, 1
      %p128 = scmp.eq.s32.totalorder %s22, 1
      %p129 = scmp.ne.s32.totalorder %s124, %s126
      %p130 = scmp.eq.s32.totalorder %s22, 0
      %p131 = por %p129, %p130
      %p132 = scmp.ne.s32.totalorder %s124, %s126
      %p133 = scmp.eq.s32.totalorder %s27, 1
      %p134 = por %p132, %p133
      %p135 = scmp.ne.s32.totalorder %s126, %s127
      %p136 = scmp.eq.s32.totalorder %s27, 0
      %p137 = por %p135, %p136
      %p138 = scmp.ne.s32.totalorder %s126, %s127
      %p139 = scmp.eq.s32.totalorder %s28, 1
      %p140 = por %p138, %p139
      %p142 = scmp.ne.s32.totalorder %s127, %s141
      %p143 = scmp.eq.s32.totalorder %s28, 0
      %p144 = por %p142, %p143
      %s146 = sadd.s32 %s145, 1
      %p149 = scmp.eq.s32.totalorder %s22, 1
      %p150 = scmp.ne.s32.totalorder %s145, %s147
      %p151 = scmp.eq.s32.totalorder %s22, 0
      %p152 = por %p150, %p151
      %p153 = scmp.ne.s32.totalorder %s145, %s147
      %p154 = scmp.eq.s32.totalorder %s27, 1
      %p155 = por %p153, %p154
      %p156 = scmp.ne.s32.totalorder %s147, %s148
      %p157 = scmp.eq.s32.totalorder %s27, 0
      %p158 = por %p156, %p157
      %p159 = scmp.ne.s32.totalorder %s147, %s148
      %p160 = scmp.eq.s32.totalorder %s28, 1
      %p161 = por %p159, %p160
      %p163 = scmp.ne.s32.totalorder %s148, %s162
      %p164 = scmp.eq.s32.totalorder %s28, 0
      %p165 = por %p163, %p164
      %s167 = sadd.s32 %s166, 1
      %p170 = scmp.eq.s32.totalorder %s22, 1
      %p171 = scmp.ne.s32.totalorder %s166, %s168
      %p172 = scmp.eq.s32.totalorder %s22, 0
      %p173 = por %p171, %p172
      %p174 = scmp.ne.s32.totalorder %s166, %s168
      %p175 = scmp.eq.s32.totalorder %s27, 1
      %p176 = por %p174, %p175
      %p177 = scmp.ne.s32.totalorder %s168, %s169
      %p178 = scmp.eq.s32.totalorder %s27, 0
      %p179 = por %p177, %p178
      %p180 = scmp.ne.s32.totalorder %s168, %s169
      %p181 = scmp.eq.s32.totalorder %s28, 1
      %p182 = por %p180, %p181
      %p184 = scmp.ne.s32.totalorder %s169, %s183
      %p185 = scmp.eq.s32.totalorder %s28, 0
      %p186 = por %p184, %p185
      %s187 = ssub.s32 %s22, %s29
      %p188 = scmp.eq.s32.totalorder %s187, 0
      %s190 = sadd.s32 %s189, 1
      %s191 = scalar_select %p188, %s189, %s190
      %p194 = pneg %p188
      %p195 = scmp.eq.s32.totalorder %s22, 1
      %p196 = por %p194, %p195
      %p197 = scmp.ne.s32.totalorder %s189, %s192
      %p198 = scmp.eq.s32.totalorder %s22, 0
      %p199 = por %p197, %p198
      %p200 = scmp.ne.s32.totalorder %s189, %s192
      %p201 = scmp.eq.s32.totalorder %s27, 1
      %p202 = por %p200, %p201
      %p203 = scmp.ne.s32.totalorder %s192, %s193
      %p204 = scmp.eq.s32.totalorder %s27, 0
      %p205 = por %p203, %p204
      %p206 = scmp.ne.s32.totalorder %s192, %s193
      %p207 = scmp.eq.s32.totalorder %s28, 1
      %p208 = por %p206, %p207
      %p210 = scmp.ne.s32.totalorder %s193, %s209
      %p211 = scmp.eq.s32.totalorder %s28, 0
      %p212 = por %p210, %p211
      %p213 = scmp.le.s32.totalorder 1, %s22
      %p214 = scmp.lt.s32.totalorder %s22, 3
      %p215 = pnand %p213, %p214
      %p216 = pneg %p215
      // Predicated region
      $region9: #{tpu_custom_call.1} parent=5 // pred_check
        _
      $region10: #{tpu_custom_call.1} parent=5 // pred_check_branch
        %218 = sbr.rel (%p215) target = $region12
      $region11: #{tpu_custom_call.1} parent=5 // pred_region
        %s219 = ssub.s32 %s22, 1
        // Predicated region
        $region13: #{tpu_custom_call.1} parent=11 // pred_check
          %p220 = pneg %p95
        $region14: #{tpu_custom_call.1} parent=11 // pred_check_branch
          %222 = sbr.rel (%p220) target = $region16
        $region15: #{tpu_custom_call.1} parent=11 // pred_region
          %s224 = ssub.s32 512, 512
          %225 = vsyncadd [#allocation6], %s224
          %s226 = sshll.u32 [#allocation7], 4
          %s227 = int_to_ptr.vmem [resolvable:$true] %s226
          %232 = dma.hbm_to_vmem [thread:$0]  %s2, 512, %s227, [#allocation6], 256, 256, 16
        $region16: #{tpu_custom_call.1} parent=11 // pred_fallthru
          _
        // Predicated region
        $region17: #{tpu_custom_call.1} parent=11 // pred_check
          %p233 = pneg %p116
        $region18: #{tpu_custom_call.1} parent=11 // pred_check_branch
          %235 = sbr.rel (%p233) target = $region20
        $region19: #{tpu_custom_call.1} parent=11 // pred_region
          _
        $region20: #{tpu_custom_call.1} parent=11 // pred_fallthru
          _
        // Predicated region
        $region21: #{tpu_custom_call.1} parent=11 // pred_check
          %p236 = pneg %p137
        $region22: #{tpu_custom_call.1} parent=11 // pred_check_branch
          %238 = sbr.rel (%p236) target = $region24
        $region23: #{tpu_custom_call.1} parent=11 // pred_region
          _
        $region24: #{tpu_custom_call.1} parent=11 // pred_fallthru
          _
        // Predicated region
        $region25: #{tpu_custom_call.1} parent=11 // pred_check
          %p239 = pneg %p158
        $region26: #{tpu_custom_call.1} parent=11 // pred_check_branch
          %241 = sbr.rel (%p239) target = $region28
        $region27: #{tpu_custom_call.1} parent=11 // pred_region
          _
        $region28: #{tpu_custom_call.1} parent=11 // pred_fallthru
          _
        // Predicated region
        $region29: #{tpu_custom_call.1} parent=11 // pred_check
          %p242 = pneg %p179
        $region30: #{tpu_custom_call.1} parent=11 // pred_check_branch
          %244 = sbr.rel (%p242) target = $region32
        $region31: #{tpu_custom_call.1} parent=11 // pred_region
          _
        $region32: #{tpu_custom_call.1} parent=11 // pred_fallthru
          _
      $region12: #{tpu_custom_call.1} parent=5 // pred_fallthru
        _
      %p245 = scmp.lt.s32.totalorder %s22, 2
      // Predicated region
      $region33: #{tpu_custom_call.1} parent=5 // pred_check
        %p246 = pneg %p245
      $region34: #{tpu_custom_call.1} parent=5 // pred_check_branch
        %248 = sbr.rel (%p246) target = $region36
      $region35: #{tpu_custom_call.1} parent=5 // pred_region
        // Predicated region
        $region37: #{tpu_custom_call.1} parent=35 // pred_check
          %p249 = pneg %p42
        $region38: #{tpu_custom_call.1} parent=35 // pred_check_branch
          %251 = sbr.rel (%p249) target = $region40
        $region39: #{tpu_custom_call.1} parent=35 // pred_region
          %s252 = sand.u32 %s32, 1
          %s253 = scalar_lea.sflag [#allocation3], %s252
          %s254 = sand.u32 %s32, 1
          %s255 = smul.addr %s254, 16
          %s256 = scalar_lea.vmem [#allocation2], %s255
          %s258 = ssub.s32 256, 256
          %259 = vsyncadd %s253, %s258
          %s260 = smul.addr %s22, 2
          %s261 = smul.addr %s260, 128
          %s262 = scalar_lea.hbm %s0, %s261
          %s264 = sshll.u32 %s256, 4
          %s265 = int_to_ptr.vmem [resolvable:$true] %s264
          %267 = dma.hbm_to_vmem [thread:$0]  %s262, 256, %s265, %s253
        $region40: #{tpu_custom_call.1} parent=35 // pred_fallthru
          _
        // Predicated region
        $region41: #{tpu_custom_call.1} parent=35 // pred_check
          %p268 = pneg %p68
        $region42: #{tpu_custom_call.1} parent=35 // pred_check_branch
          %270 = sbr.rel (%p268) target = $region44
        $region43: #{tpu_custom_call.1} parent=35 // pred_region
          %s271 = sand.u32 %s22, 1
          %s272 = scalar_lea.sflag [#allocation6], %s271
          %s273 = sand.u32 %s58, 1
          %s274 = smul.addr %s273, 16
          %s275 = scalar_lea.vmem [#allocation5], %s274
          %s277 = ssub.s32 256, 256
          %278 = vsyncadd %s272, %s277
          %s279 = smul.addr %s22, 2
          %s280 = smul.addr %s279, 128
          %s281 = scalar_lea.hbm %s1, %s280
          %s283 = sshll.u32 %s275, 4
          %s284 = int_to_ptr.vmem [resolvable:$true] %s283
          %286 = dma.hbm_to_vmem [thread:$0]  %s281, 256, %s284, %s272
        $region44: #{tpu_custom_call.1} parent=35 // pred_fallthru
          _
      $region36: #{tpu_custom_call.1} parent=5 // pred_fallthru
        _
      %p287 = scmp.le.s32.totalorder 1, %s22
      %p288 = scmp.lt.s32.totalorder %s22, 3
      %p289 = pnand %p287, %p288
      %p290 = pneg %p289
      // Predicated region
      $region45: #{tpu_custom_call.1} parent=5 // pred_check
        _
      $region46: #{tpu_custom_call.1} parent=5 // pred_check_branch
        %292 = sbr.rel (%p289) target = $region48
      $region47: #{tpu_custom_call.1} parent=5 // pred_region
        %s293 = ssub.s32 %s22, 1
        %s294 = sand.u32 %s35, 1
        %s295 = scalar_lea.sflag [#allocation3], %s294
        %s296 = sand.u32 %s35, 1
        %s297 = smul.addr %s296, 16
        %s298 = scalar_lea.vmem [#allocation2], %s297
        // Predicated region
        $region49: #{tpu_custom_call.1} parent=47 // pred_check
          %p299 = pneg %p48
        $region50: #{tpu_custom_call.1} parent=47 // pred_check_branch
          %301 = sbr.rel (%p299) target = $region52
        $region51: #{tpu_custom_call.1} parent=47 // pred_region
          %302 = dma.done %s295, 256
        $region52: #{tpu_custom_call.1} parent=47 // pred_fallthru
          _
        %s303 = sand.u32 %s27, 1
        %s304 = scalar_lea.sflag [#allocation6], %s303
        %s305 = sand.u32 %s61, 1
        %s306 = smul.addr %s305, 16
        %s307 = scalar_lea.vmem [#allocation5], %s306
        // Predicated region
        $region53: #{tpu_custom_call.1} parent=47 // pred_check
          %p308 = pneg %p74
        $region54: #{tpu_custom_call.1} parent=47 // pred_check_branch
          %310 = sbr.rel (%p308) target = $region56
        $region55: #{tpu_custom_call.1} parent=47 // pred_region
          %311 = dma.done %s304, 256
        $region56: #{tpu_custom_call.1} parent=47 // pred_fallthru
          _
        // Predicated region
        $region57: #{tpu_custom_call.1} parent=47 // pred_check
          %p312 = pneg %p95
        $region58: #{tpu_custom_call.1} parent=47 // pred_check_branch
          %314 = sbr.rel (%p312) target = $region60
        $region59: #{tpu_custom_call.1} parent=47 // pred_region
          %315 = dma.done [#allocation6], 512
        $region60: #{tpu_custom_call.1} parent=47 // pred_fallthru
          _
        %s316 = sand.u32 %s35, 1
        %s317 = scalar_lea.sflag [#allocation3], %s316
        %s318 = sand.u32 %s35, 1
        %s319 = smul.addr %s318, 16
        %s320 = scalar_lea.vmem [#allocation2], %s319
        %p321 = pneg %p48
        %p322 = pneg %p45
        %s323 = sand.u32 %s27, 1
        %s324 = scalar_lea.sflag [#allocation6], %s323
        %s325 = sand.u32 %s61, 1
        %s326 = smul.addr %s325, 16
        %s327 = scalar_lea.vmem [#allocation5], %s326
        %p328 = pneg %p74
        %p329 = pneg %p71
        %p330 = pneg %p95
        %p331 = pneg %p92
        %p332 = pneg %p116
        %p333 = pneg %p113
        %p334 = pneg %p137
        %p335 = pneg %p134
        %p336 = pneg %p158
        %p337 = pneg %p155
        %p338 = pneg %p179
        %p339 = pneg %p176
        %p340 = pneg %p205
        %p341 = pneg %p202
        %s342 = sand.u32 %s192, 1
        %s343 = scalar_lea.sflag [#allocation4], %s342
        %s344 = sand.u32 %s192, 1
        %s345 = smul.addr %s344, 16
        %s346 = scalar_lea.vmem [#allocation8], %s345
        %v347 = vld [vmem:[#allocation7] sm:$0xff]
        %v348 = vld [vmem:[#allocation7 + $0x8] sm:$0xff]
        %v349 = vld [vmem:[#allocation7 + $0x10] sm:$0x1]
        %v350 = vld [vmem:[#allocation7 + $0x18] sm:$0x1]
        %v351 = vld [vmem:[%s298] sm:$0xff]
        %v352 = vld [vmem:[%s298 + $0x8] sm:$0xff]
        %v353 = vld [vmem:[%s307] sm:$0xff]
        %v354 = vld [vmem:[%s307 + $0x8] sm:$0xff]
        %v355 = vadd.f32 %v351, %v353
        %v356 = vadd.f32 %v352, %v354
        %357 = vrot.lane.b32.xlu0 %v355, 17
        %v358 = vpop.permute.xlu0 %357
        %359 = vrot.lane.b32.xlu0 %v356, 17
        %v360 = vpop.permute.xlu0 %359
        %v361 = vlaneseq
        %v362 = vand.u32 %v361, 127
        %vm363 = vcmp.lt.s32.totalorder %v362, 17
        %v364 = vsel %vm363, %v358, %v360
        %v365 = vsel %vm363, %v360, %v358
        %v366 = vlaneseq
        %v367 = vshrl.u32 %v366, 7
        %v368 = vsub.s32 0, %v367
        %v369 = vrot.slane %v347, %v368
        %v370 = vlaneseq
        %v371 = vshrl.u32 %v370, 7
        %v372 = vsub.s32 0, %v371
        %v373 = vrot.slane %v348, %v372
        %v374 = vmul.f32 %v365, %v369
        %v375 = vmul.f32 %v364, %v373
        %376 = vrot.lane.b32.xlu0 %v355, 16
        %v377 = vpop.permute.xlu0 %376
        %378 = vrot.lane.b32.xlu0 %v356, 16
        %v379 = vpop.permute.xlu0 %378
        %vm380 = vcmp.lt.s32.totalorder %v362, 16
        %v381 = vsel %vm380, %v377, %v379
        %v382 = vsel %vm380, %v379, %v377
        %v383 = vlaneseq
        %v384 = vshrl.u32 %v383, 7
        %v385 = vsub.s32 1, %v384
        %v386 = vrot.slane %v347, %v385
        %v387 = vlaneseq
        %v388 = vshrl.u32 %v387, 7
        %v389 = vsub.s32 1, %v388
        %v390 = vrot.slane %v348, %v389
        %v391 = vmul.f32 %v382, %v386
        %v392 = vmul.f32 %v381, %v390
        %393 = vrot.lane.b32.xlu0 %v355, 15
        %v394 = vpop.permute.xlu0 %393
        %395 = vrot.lane.b32.xlu0 %v356, 15
        %v396 = vpop.permute.xlu0 %395
        %vm397 = vcmp.lt.s32.totalorder %v362, 15
        %v398 = vsel %vm397, %v394, %v396
        %v399 = vsel %vm397, %v396, %v394
        %v400 = vlaneseq
        %v401 = vshrl.u32 %v400, 7
        %v402 = vsub.s32 2, %v401
        %v403 = vrot.slane %v347, %v402
        %v404 = vlaneseq
        %v405 = vshrl.u32 %v404, 7
        %v406 = vsub.s32 2, %v405
        %v407 = vrot.slane %v348, %v406
        %v408 = vmul.f32 %v399, %v403
        %v409 = vmul.f32 %v398, %v407
        %410 = vrot.lane.b32.xlu0 %v355, 1
        %v411 = vpop.permute.xlu0 %410
        %412 = vrot.lane.b32.xlu0 %v356, 1
        %v413 = vpop.permute.xlu0 %412
        %vm414 = vcmp.lt.s32.totalorder %v362, 1
        %v415 = vsel %vm414, %v411, %v413
        %v416 = vsel %vm414, %v413, %v411
        %v417 = vlaneseq
        %v418 = vshrl.u32 %v417, 7
        %v419 = vsub.s32 3, %v418
        %v420 = vrot.slane %v347, %v419
        %v421 = vlaneseq
        %v422 = vshrl.u32 %v421, 7
        %v423 = vsub.s32 3, %v422
        %v424 = vrot.slane %v348, %v423
        %v425 = vmul.f32 %v416, %v420
        %v426 = vmul.f32 %v415, %v424
        %427 = vrot.lane.b32.xlu0 %v355, 127
        %v428 = vpop.permute.xlu0 %427
        %429 = vrot.lane.b32.xlu0 %v356, 127
        %v430 = vpop.permute.xlu0 %429
        %vm431 = vcmp.lt.s32.totalorder %v362, 127
        %v432 = vsel %vm431, %v428, %v430
        %v433 = vsel %vm431, %v430, %v428
        %v434 = vlaneseq
        %v435 = vshrl.u32 %v434, 7
        %v436 = vsub.s32 5, %v435
        %v437 = vrot.slane %v347, %v436
        %v438 = vlaneseq
        %v439 = vshrl.u32 %v438, 7
        %v440 = vsub.s32 5, %v439
        %v441 = vrot.slane %v348, %v440
        %v442 = vmul.f32 %v432, %v437
        %v443 = vmul.f32 %v433, %v441
        %444 = vrot.lane.b32.xlu0 %v355, 113
        %v445 = vpop.permute.xlu0 %444
        %446 = vrot.lane.b32.xlu0 %v356, 113
        %v447 = vpop.permute.xlu0 %446
        %vm448 = vcmp.lt.s32.totalorder %v362, 113
        %v449 = vsel %vm448, %v445, %v447
        %v450 = vsel %vm448, %v447, %v445
        %v451 = vlaneseq
        %v452 = vshrl.u32 %v451, 7
        %v453 = vsub.s32 6, %v452
        %v454 = vrot.slane %v347, %v453
        %v455 = vlaneseq
        %v456 = vshrl.u32 %v455, 7
        %v457 = vsub.s32 6, %v456
        %v458 = vrot.slane %v348, %v457
        %v459 = vmul.f32 %v449, %v454
        %v460 = vmul.f32 %v450, %v458
        %461 = vrot.lane.b32.xlu0 %v355, 112
        %v462 = vpop.permute.xlu0 %461
        %463 = vrot.lane.b32.xlu0 %v356, 112
        %v464 = vpop.permute.xlu0 %463
        %vm465 = vcmp.lt.s32.totalorder %v362, 112
        %v466 = vsel %vm465, %v462, %v464
        %v467 = vsel %vm465, %v464, %v462
        %v468 = vlaneseq
        %v469 = vshrl.u32 %v468, 7
        %v470 = vsub.s32 7, %v469
        %v471 = vrot.slane %v347, %v470
        %v472 = vlaneseq
        %v473 = vshrl.u32 %v472, 7
        %v474 = vsub.s32 7, %v473
        %v475 = vrot.slane %v348, %v474
        %v476 = vmul.f32 %v466, %v471
        %v477 = vmul.f32 %v467, %v475
        %478 = vrot.lane.b32.xlu0 %v355, 111
        %v479 = vpop.permute.xlu0 %478
        %480 = vrot.lane.b32.xlu0 %v356, 111
        %v481 = vpop.permute.xlu0 %480
        %vm482 = vcmp.lt.s32.totalorder %v362, 111
        %v483 = vsel %vm482, %v479, %v481
        %v484 = vsel %vm482, %v481, %v479
        %v485 = vlaneseq
        %v486 = vshrl.u32 %v485, 7
        %v487 = vsub.s32 0, %v486
        %v488 = vrot.slane %v349, %v487
        %v489 = vlaneseq
        %v490 = vshrl.u32 %v489, 7
        %v491 = vsub.s32 0, %v490
        %v492 = vrot.slane %v350, %v491
        %v493 = vmul.f32 %v483, %v488
        %v494 = vmul.f32 %v484, %v492
        %v495 = vld [vmem:[%s3] sm:$0xff]
        %v496 = vld [vmem:[%s4] sm:$0xff]
        %498 = vset.pattern.permute.xlu0 0
        %499 = vperm.xlu0 %498, %v496
        %v500 = vpop.permute.xlu0 %499
        %vm502 = vcmask 588800
        %v504 = vsel %vm502, %v495, 0
        %506 = vmatprep.subr.mxu0 %v375
        %507 = vmatpush1.msra.mxu0 %v374
        %508 = vmatprep.subr.mxu0 %v392
        %509 = vmatpush1.msra.mxu0 %v391
        %510 = vmatprep.subr.mxu0 %v409
        %511 = vmatpush1.msra.mxu0 %v408
        %512 = vmatprep.subr.mxu0 %v426
        %513 = vmatpush1.msra.mxu0 %v425
        %514 = vmatprep.subr.mxu0 %v356
        %515 = vmatpush1.msra.mxu0 %v355
        %516 = vmatprep.subr.mxu0 %v443
        %517 = vmatpush1.msra.mxu0 %v442
        %518 = vmatprep.subr.mxu0 %v460
        %519 = vmatpush1.msra.mxu0 %v459
        %520 = vmatprep.subr.mxu0 %v477
        %521 = vmatpush1.msra.mxu0 %v476
        %522 = vmatprep.subr.mxu0 %v494
        %523 = vmatpush1.msra.mxu0 %v493
        %524 = vmatprep.subr.mxu0 0.0
        %525 = vmatpush1.msra.mxu0 0.0
        %526 = vmatprep.subr.mxu0 0.0
        %527 = vmatpush1.msra.mxu0 0.0
        %528 = vmatprep.subr.mxu0 0.0
        %529 = vmatpush1.msra.mxu0 0.0
        %530 = vmatprep.subr.mxu0 0.0
        %531 = vmatpush1.msra.mxu0 0.0
        %532 = vmatprep.subr.mxu0 0.0
        %533 = vmatpush1.msra.mxu0 0.0
        %534 = vmatprep.subr.mxu0 0.0
        %535 = vmatpush1.msra.mxu0 0.0
        %536 = vmatprep.subr.mxu0 0.0
        %537 = vmatpush1.msra.mxu0 0.0
        %538 = vmatprep.subr.mxu0 0.0
        %539 = vmatpush1.msra.mxu0 0.0
        %540 = vmatprep.subr.mxu0 0.0
        %541 = vmatpush1.msra.mxu0 0.0
        %542 = vmatprep.subr.mxu0 0.0
        %543 = vmatpush1.msra.mxu0 0.0
        %544 = vmatprep.subr.mxu0 0.0
        %545 = vmatpush1.msra.mxu0 0.0
        %546 = vmatprep.subr.mxu0 0.0
        %547 = vmatpush1.msra.mxu0 0.0
        %548 = vmatprep.subr.mxu0 0.0
        %549 = vmatpush1.msra.mxu0 0.0
        %550 = vmatprep.subr.mxu0 0.0
        %551 = vmatpush1.msra.mxu0 0.0
        %552 = vmatprep.subr.mxu0 0.0
        %553 = vmatpush1.msra.mxu0 0.0
        %554 = vmatprep.subr.mxu0 0.0
        %555 = vmatpush1.msra.mxu0 0.0
        %556 = vmatprep.subr.mxu0 0.0
        %557 = vmatpush1.msra.mxu0 0.0
        %558 = vmatprep.subr.mxu0 0.0
        %559 = vmatpush1.msra.mxu0 0.0
        %560 = vmatprep.subr.mxu0 0.0
        %561 = vmatpush1.msra.mxu0 0.0
        %562 = vmatprep.subr.mxu0 0.0
        %563 = vmatpush1.msra.mxu0 0.0
        %564 = vmatprep.subr.mxu0 0.0
        %565 = vmatpush1.msra.mxu0 0.0
        %566 = vmatprep.subr.mxu0 0.0
        %567 = vmatpush1.msra.mxu0 0.0
        %568 = vmatprep.subr.mxu0 0.0
        %569 = vmatpush1.msra.mxu0 0.0
        %570 = vmatprep.mubr.f32.mxu0 0.0
        %571 = vmatmul.mubr.f32.gmra.mrb[0].mxu0 %v504
        %v572 = vpop.f32.mrb[0].mxu0
        %v573 = vadd.f32 %v500, %v572
        %v574 = vpop.f32.mrb[0].mxu0
        %v575 = vadd.f32 %v500, %v574
        %576 = vdwg.mxu0
        %v577 = vmax.f32 %v573, 0.0
        %v578 = vmax.f32 %v575, 0.0
        %579 = vrot.lane.b32.xlu0 %v577, 17
        %v580 = vpop.permute.xlu0 %579
        %581 = vrot.lane.b32.xlu0 %v578, 17
        %v582 = vpop.permute.xlu0 %581
        %v583 = vsel %vm363, %v580, %v582
        %v584 = vsel %vm363, %v582, %v580
        %v585 = vmul.f32 %v584, %v369
        %v586 = vmul.f32 %v583, %v373
        %587 = vrot.lane.b32.xlu0 %v577, 16
        %v588 = vpop.permute.xlu0 %587
        %589 = vrot.lane.b32.xlu0 %v578, 16
        %v590 = vpop.permute.xlu0 %589
        %v591 = vsel %vm380, %v588, %v590
        %v592 = vsel %vm380, %v590, %v588
        %v593 = vmul.f32 %v592, %v386
        %v594 = vmul.f32 %v591, %v390
        %595 = vrot.lane.b32.xlu0 %v577, 15
        %v596 = vpop.permute.xlu0 %595
        %597 = vrot.lane.b32.xlu0 %v578, 15
        %v598 = vpop.permute.xlu0 %597
        %v599 = vsel %vm397, %v596, %v598
        %v600 = vsel %vm397, %v598, %v596
        %v601 = vmul.f32 %v600, %v403
        %v602 = vmul.f32 %v599, %v407
        %603 = vrot.lane.b32.xlu0 %v577, 1
        %v604 = vpop.permute.xlu0 %603
        %605 = vrot.lane.b32.xlu0 %v578, 1
        %v606 = vpop.permute.xlu0 %605
        %v607 = vsel %vm414, %v604, %v606
        %v608 = vsel %vm414, %v606, %v604
        %v609 = vmul.f32 %v608, %v420
        %v610 = vmul.f32 %v607, %v424
        %611 = vrot.lane.b32.xlu0 %v577, 127
        %v612 = vpop.permute.xlu0 %611
        %613 = vrot.lane.b32.xlu0 %v578, 127
        %v614 = vpop.permute.xlu0 %613
        %v615 = vsel %vm431, %v612, %v614
        %v616 = vsel %vm431, %v614, %v612
        %v617 = vmul.f32 %v615, %v437
        %v618 = vmul.f32 %v616, %v441
        %619 = vrot.lane.b32.xlu0 %v577, 113
        %v620 = vpop.permute.xlu0 %619
        %621 = vrot.lane.b32.xlu0 %v578, 113
        %v622 = vpop.permute.xlu0 %621
        %v623 = vsel %vm448, %v620, %v622
        %v624 = vsel %vm448, %v622, %v620
        %v625 = vmul.f32 %v623, %v454
        %v626 = vmul.f32 %v624, %v458
        %627 = vrot.lane.b32.xlu0 %v577, 112
        %v628 = vpop.permute.xlu0 %627
        %629 = vrot.lane.b32.xlu0 %v578, 112
        %v630 = vpop.permute.xlu0 %629
        %v631 = vsel %vm465, %v628, %v630
        %v632 = vsel %vm465, %v630, %v628
        %v633 = vmul.f32 %v631, %v471
        %v634 = vmul.f32 %v632, %v475
        %635 = vrot.lane.b32.xlu0 %v577, 111
        %v636 = vpop.permute.xlu0 %635
        %637 = vrot.lane.b32.xlu0 %v578, 111
        %v638 = vpop.permute.xlu0 %637
        %v639 = vsel %vm482, %v636, %v638
        %v640 = vsel %vm482, %v638, %v636
        %v641 = vmul.f32 %v639, %v488
        %v642 = vmul.f32 %v640, %v492
        %v643 = vld [vmem:[%s5] sm:$0xff]
        %v644 = vld [vmem:[%s6] sm:$0xff]
        %646 = vset.pattern.permute.xlu0 0
        %647 = vperm.xlu0 %646, %v644
        %v648 = vpop.permute.xlu0 %647
        %v651 = vsel %vm502, %v643, 0
        %653 = vmatprep.subr.mxu0 %v586
        %654 = vmatpush1.msra.mxu0 %v585
        %655 = vmatprep.subr.mxu0 %v594
        %656 = vmatpush1.msra.mxu0 %v593
        %657 = vmatprep.subr.mxu0 %v602
        %658 = vmatpush1.msra.mxu0 %v601
        %659 = vmatprep.subr.mxu0 %v610
        %660 = vmatpush1.msra.mxu0 %v609
        %661 = vmatprep.subr.mxu0 %v578
        %662 = vmatpush1.msra.mxu0 %v577
        %663 = vmatprep.subr.mxu0 %v618
        %664 = vmatpush1.msra.mxu0 %v617
        %665 = vmatprep.subr.mxu0 %v626
        %666 = vmatpush1.msra.mxu0 %v625
        %667 = vmatprep.subr.mxu0 %v634
        %668 = vmatpush1.msra.mxu0 %v633
        %669 = vmatprep.subr.mxu0 %v642
        %670 = vmatpush1.msra.mxu0 %v641
        %671 = vmatprep.subr.mxu0 0.0
        %672 = vmatpush1.msra.mxu0 0.0
        %673 = vmatprep.subr.mxu0 0.0
        %674 = vmatpush1.msra.mxu0 0.0
        %675 = vmatprep.subr.mxu0 0.0
        %676 = vmatpush1.msra.mxu0 0.0
        %677 = vmatprep.subr.mxu0 0.0
        %678 = vmatpush1.msra.mxu0 0.0
        %679 = vmatprep.subr.mxu0 0.0
        %680 = vmatpush1.msra.mxu0 0.0
        %681 = vmatprep.subr.mxu0 0.0
        %682 = vmatpush1.msra.mxu0 0.0
        %683 = vmatprep.subr.mxu0 0.0
        %684 = vmatpush1.msra.mxu0 0.0
        %685 = vmatprep.subr.mxu0 0.0
        %686 = vmatpush1.msra.mxu0 0.0
        %687 = vmatprep.subr.mxu0 0.0
        %688 = vmatpush1.msra.mxu0 0.0
        %689 = vmatprep.subr.mxu0 0.0
        %690 = vmatpush1.msra.mxu0 0.0
        %691 = vmatprep.subr.mxu0 0.0
        %692 = vmatpush1.msra.mxu0 0.0
        %693 = vmatprep.subr.mxu0 0.0
        %694 = vmatpush1.msra.mxu0 0.0
        %695 = vmatprep.subr.mxu0 0.0
        %696 = vmatpush1.msra.mxu0 0.0
        %697 = vmatprep.subr.mxu0 0.0
        %698 = vmatpush1.msra.mxu0 0.0
        %699 = vmatprep.subr.mxu0 0.0
        %700 = vmatpush1.msra.mxu0 0.0
        %701 = vmatprep.subr.mxu0 0.0
        %702 = vmatpush1.msra.mxu0 0.0
        %703 = vmatprep.subr.mxu0 0.0
        %704 = vmatpush1.msra.mxu0 0.0
        %705 = vmatprep.subr.mxu0 0.0
        %706 = vmatpush1.msra.mxu0 0.0
        %707 = vmatprep.subr.mxu0 0.0
        %708 = vmatpush1.msra.mxu0 0.0
        %709 = vmatprep.subr.mxu0 0.0
        %710 = vmatpush1.msra.mxu0 0.0
        %711 = vmatprep.subr.mxu0 0.0
        %712 = vmatpush1.msra.mxu0 0.0
        %713 = vmatprep.subr.mxu0 0.0
        %714 = vmatpush1.msra.mxu0 0.0
        %715 = vmatprep.subr.mxu0 0.0
        %716 = vmatpush1.msra.mxu0 0.0
        %717 = vmatprep.mubr.f32.mxu0 0.0
        %718 = vmatmul.mubr.f32.gmra.mrb[0].mxu0 %v651
        %v719 = vpop.f32.mrb[0].mxu0
        %v720 = vadd.f32 %v648, %v719
        %v721 = vpop.f32.mrb[0].mxu0
        %v722 = vadd.f32 %v648, %v721
        %723 = vdwg.mxu0
        %v724 = vadd.f32 %v720, %v351
        %v725 = vadd.f32 %v722, %v352
        %v726 = vmax.f32 %v724, 0.0
        %v727 = vmax.f32 %v725, 0.0
        %728 = vst [vmem:[%s346] sm:$0xff] %v726
        %729 = vst [vmem:[%s346 + $0x8] sm:$0xff] %v727
        %s730 = sand.u32 %s192, 1
        %s731 = scalar_lea.sflag [#allocation4], %s730
        %s732 = sand.u32 %s192, 1
        %s733 = smul.addr %s732, 16
        %s734 = scalar_lea.vmem [#allocation8], %s733
        // Predicated region
        $region61: #{tpu_custom_call.1} parent=47 // pred_check
          %p735 = pneg %p202
        $region62: #{tpu_custom_call.1} parent=47 // pred_check_branch
          %737 = sbr.rel (%p735) target = $region64
        $region63: #{tpu_custom_call.1} parent=47 // pred_region
          %s739 = ssub.s32 256, 256
          %740 = vsyncadd %s731, %s739
          %s741 = smul.addr %s27, 2
          %s742 = smul.addr %s741, 128
          %s743 = scalar_lea.hbm %s7, %s742
          %s745 = sshll.u32 %s734, 4
          %s746 = int_to_ptr.vmem [resolvable:$true] %s745
          %748 = dma.vmem_to_hbm [thread:$0]  %s746, 256, %s743, %s731
        $region64: #{tpu_custom_call.1} parent=47 // pred_fallthru
          _
      $region48: #{tpu_custom_call.1} parent=5 // pred_fallthru
        _
      %p749 = scmp.le.s32.totalorder 2, %s22
      // Predicated region
      $region65: #{tpu_custom_call.1} parent=5 // pred_check
        %p750 = pneg %p749
      $region66: #{tpu_custom_call.1} parent=5 // pred_check_branch
        %752 = sbr.rel (%p750) target = $region68
      $region67: #{tpu_custom_call.1} parent=5 // pred_region
        %s753 = ssub.s32 %s22, 2
        // Predicated region
        $region69: #{tpu_custom_call.1} parent=67 // pred_check
          %p754 = pneg %p208
        $region70: #{tpu_custom_call.1} parent=67 // pred_check_branch
          %756 = sbr.rel (%p754) target = $region72
        $region71: #{tpu_custom_call.1} parent=67 // pred_region
          %s757 = sand.u32 %s193, 1
          %s758 = scalar_lea.sflag [#allocation4], %s757
          %s759 = sand.u32 %s193, 1
          %s760 = smul.addr %s759, 16
          %s761 = scalar_lea.vmem [#allocation8], %s760
          %762 = dma.done %s758, 256
        $region72: #{tpu_custom_call.1} parent=67 // pred_fallthru
          _
      $region68: #{tpu_custom_call.1} parent=5 // pred_fallthru
        _
    $region6: #{tpu_custom_call.1} parent=1 // loop_footer
      %s26 = sadd.s32 1, %s22
    $region7: #{tpu_custom_call.1} parent=1 // loop_footer_branch
      %21 = sbr.rel target = $region3
    $region8: #{tpu_custom_call.1} parent=1 // loop_exit
      _
    %763 = vsyncpa [#allocation3], 1
    %s764 = scalar_lea.sflag [#allocation3], 1
    %765 = vsyncpa %s764, 1
    %766 = vsyncpa [#allocation6], 1
    %s767 = scalar_lea.sflag [#allocation6], 1
    %768 = vsyncpa %s767, 1
    %769 = vsyncpa [#allocation4], 1
    %s770 = scalar_lea.sflag [#allocation4], 1
    %771 = vsyncpa %s770, 1

</llo_original>
